<compile_context>
chip_gen: v6e
topology: v6e:2x2x1
jax: 0.10.0
libtpu: 0.0.40
codegen_flags: <defaults>
</compile_context>

<pallas_src>
import functools

import jax
import jax.numpy as jnp
from jax.experimental import pallas as pl
from jax.experimental.pallas import tpu as pltpu


def _rotary_kernel(c_ref, s_ref, x_ref, o_ref, *, compute_dtype):
    # x_ref/o_ref : (block_t, H, D)   (batch dim squeezed by BlockSpec)
    # c_ref/s_ref : (block_t, D) full-width tables C=[cos,cos], S=[sin,-sin]
    x = x_ref[...].astype(compute_dtype)
    half = x.shape[-1] // 2
    # Swap halves along the lane axis: xs = [x2, x1].
    xs = jnp.concatenate([x[..., half:], x[..., :half]], axis=-1)
    c = c_ref[...].astype(compute_dtype)[:, None, :]   # (block_t, 1, D) -> bcast over H
    s = s_ref[...].astype(compute_dtype)[:, None, :]
    # first half : x1*cos + x2*sin ;  second half: x2*cos - x1*sin
    o_ref[...] = (x * c + xs * s).astype(o_ref.dtype)


def make_rotary_tables(dim: int, max_seq_len: int):
    """Deterministic buffer construction, mirrors Rotary.__init__."""
    angular_freq = (1.0 / 10000.0) ** jnp.linspace(
        0.0, 1.0, num=dim // 4, dtype=jnp.float32
    )
    angular_freq = jnp.concatenate(
        [angular_freq, jnp.zeros((dim // 4,), dtype=jnp.float32)]
    )  # (dim//2,)
    t = jnp.arange(max_seq_len, dtype=jnp.float32)
    theta = t[:, None] * angular_freq[None, :]          # (max_seq_len, dim//2)
    return jnp.cos(theta), jnp.sin(theta)


def _vmem_capacity_bytes() -> int:
    try:
        return int(pltpu.get_tpu_info().vmem_capacity_bytes)
    except Exception:
        return 128 * 1024 * 1024   # v5e/v6e default; safe fallback


def _pick_compute_dtype(x_dtype):
    """bf16 compute on v6e/v7x; keep the f32 path on v5e and older (no bf16 VPU)."""
    if jnp.dtype(x_dtype) == jnp.dtype(jnp.float32):
        return jnp.float32
    try:
        kind = jax.devices()[0].device_kind.lower()
    except Exception:
        kind = ""
    if any(v in kind for v in ("v2", "v3", "v4", "v5")):
        return jnp.float32
    return jnp.dtype(x_dtype)


def _pick_block_t(T, H, D, itemsize, vmem_bytes):
    """Sequence-tile size: ~4 MiB blocks (2 MiB on 64-MiB-VMEM chips, e.g. v7x)."""
    target = (2 << 20) if vmem_bytes <= (64 << 20) else (4 << 20)
    rows = max(1, target // max(1, H * D * itemsize))
    bt = min(T, int(rows), 2048)
    if bt >= T:
        return T
    # second-to-last dim of the (bt, D) table block must be a multiple of 8
    return max(8, (bt // 8) * 8)


def rotary_forward(x_BTHD, cos_table, sin_table, block_t=None):
    B, T, H, D = x_BTHD.shape
    assert cos_table.shape[0] >= T, "max_seq_len must be >= sequence length"
    assert D % 4 == 0
    half = D // 2
    assert cos_table.shape[1] == half and sin_table.shape[1] == half

    # Tables in the activation dtype (halves table HBM traffic / VMEM).
    table_dtype = x_BTHD.dtype
    cos = cos_table[:T]
    sin = sin_table[:T]
    c_full = jnp.concatenate([cos, cos], axis=-1).astype(table_dtype)   # (T, D)
    s_full = jnp.concatenate([sin, -sin], axis=-1).astype(table_dtype)  # (T, D)

    vmem_cap = _vmem_capacity_bytes()
    itemsize = x_BTHD.dtype.itemsize
    if block_t is None:
        block_t = _pick_block_t(T, H, D, itemsize, vmem_cap)
    n_t = pl.cdiv(T, block_t)

    compute_dtype = _pick_compute_dtype(x_BTHD.dtype)
    kernel = functools.partial(_rotary_kernel, compute_dtype=compute_dtype)

    cost = pl.CostEstimate(
        flops=3 * B * T * H * D,
        transcendentals=0,
        bytes_accessed=2 * B * T * H * D * itemsize
        + 2 * T * D * jnp.dtype(table_dtype).itemsize,
    )
    vmem_limit = int(min(64 * 1024 * 1024, max(32 * 1024 * 1024, vmem_cap // 2)))

    return pl.pallas_call(
        kernel,
        out_shape=jax.ShapeDtypeStruct((B, T, H, D), x_BTHD.dtype),
        grid=(n_t, B),
        in_specs=[
            pl.BlockSpec((block_t, D), lambda t, b: (t, 0)),             # cos table
            pl.BlockSpec((block_t, D), lambda t, b: (t, 0)),             # sin table
            pl.BlockSpec((None, block_t, H, D), lambda t, b: (b, t, 0, 0)),  # x
        ],
        out_specs=pl.BlockSpec((None, block_t, H, D), lambda t, b: (b, t, 0, 0)),
        compiler_params=pltpu.CompilerParams(
            dimension_semantics=("parallel", "parallel"),
            vmem_limit_bytes=vmem_limit,
        ),
        cost_estimate=cost,
    )(c_full, s_full, x_BTHD)


def rotary_reference(x_BTHD, cos_table, sin_table):
    """Pure-JAX reference mirroring the PyTorch forward (f32 compute, f32 tables)."""
    T = x_BTHD.shape[1]
    cos = cos_table[None, :T, None, :]
    sin = sin_table[None, :T, None, :]
    xf = x_BTHD.astype(jnp.float32)
    half = xf.shape[-1] // 2
    x1, x2 = xf[..., :half], xf[..., half:]
    y1 = x1 * cos + x2 * sin
    y2 = -x1 * sin + x2 * cos
    return jnp.concatenate([y1, y2], axis=-1).astype(x_BTHD.dtype)


if __name__ == "__main__":
    # Small but lane-dense shapes: realistic rotary head_dim = 128.
    B, T, H, D = 2, 8, 4, 128
    MAX_SEQ_LEN = 16

    cos_table, sin_table = make_rotary_tables(D, MAX_SEQ_LEN)

    key = jax.random.PRNGKey(0)
    x = jax.random.normal(key, (B, T, H, D), dtype=jnp.float32).astype(jnp.bfloat16)

    out = rotary_forward(x, cos_table, sin_table)
    out = jax.block_until_ready(out)

    ref = rotary_reference(x, cos_table, sin_table)
    assert out.shape == x.shape and out.dtype == x.dtype
    # Slightly loose tolerance: kernel may use bf16 tables / bf16 compute on
    # v6e/v7x while the reference uses f32 tables + f32 compute.
    assert jnp.allclose(
        out.astype(jnp.float32), ref.astype(jnp.float32), atol=2e-2, rtol=2e-2
    ), "Pallas rotary kernel mismatch vs reference"

    print("KERNEL_OK")
</pallas_src>

<mosaic_0001>
module attributes {stable_mosaic.version = 11 : i64} {
  func.func @_rotary_kernel(%arg0: i32, %arg1: i32, %arg2: memref<8x128xbf16, #tpu.memory_space<vmem>>, %arg3: memref<8x128xbf16, #tpu.memory_space<vmem>>, %arg4: memref<1x8x4x128xbf16, #tpu.memory_space<vmem>>, %arg5: memref<1x8x4x128xbf16, #tpu.memory_space<vmem>>) attributes {dimension_semantics = [#tpu.dimension_semantics<parallel>, #tpu.dimension_semantics<parallel>], iteration_bounds = array<i64: 1, 2>, scalar_prefetch = 0 : i64, scratch_operands = 0 : i64, tpu.core_type = #tpu.core_type<tc>, window_params = [{transform_indices = @transform_0, window_bounds = array<i64: 8, 128>}, {transform_indices = @transform_1, window_bounds = array<i64: 8, 128>}, {transform_indices = @transform_2, window_bounds = array<i64: 1, 8, 4, 128>}, {transform_indices = @transform_3, window_bounds = array<i64: 1, 8, 4, 128>}]} {
    %c0 = arith.constant 0 : index
    %c0_0 = arith.constant 0 : index
    %c0_1 = arith.constant 0 : index
    %c0_2 = arith.constant 0 : index
    %0 = vector.load %arg4[%c0, %c0_0, %c0_1, %c0_2] : memref<1x8x4x128xbf16, #tpu.memory_space<vmem>>, vector<1x8x4x128xbf16>
    %1 = vector.shape_cast %0 : vector<1x8x4x128xbf16> to vector<8x4x128xbf16>
    %2 = vector.extract_strided_slice %1 {offsets = [0, 0, 64], sizes = [8, 4, 64], strides = [1, 1, 1]} : vector<8x4x128xbf16> to vector<8x4x64xbf16>
    %3 = vector.extract_strided_slice %1 {offsets = [0, 0, 0], sizes = [8, 4, 64], strides = [1, 1, 1]} : vector<8x4x128xbf16> to vector<8x4x64xbf16>
    %4 = tpu.concatenate %2, %3 in 2 : vector<8x4x64xbf16>, vector<8x4x64xbf16> -> vector<8x4x128xbf16>
    %c0_3 = arith.constant 0 : index
    %c0_4 = arith.constant 0 : index
    %5 = vector.load %arg2[%c0_3, %c0_4] : memref<8x128xbf16, #tpu.memory_space<vmem>>, vector<8x128xbf16>
    %6 = vector.shape_cast %5 : vector<8x128xbf16> to vector<8x1x128xbf16>
    %c0_5 = arith.constant 0 : index
    %c0_6 = arith.constant 0 : index
    %7 = vector.load %arg3[%c0_5, %c0_6] : memref<8x128xbf16, #tpu.memory_space<vmem>>, vector<8x128xbf16>
    %8 = vector.shape_cast %7 : vector<8x128xbf16> to vector<8x1x128xbf16>
    %9 = vector.broadcast %6 : vector<8x1x128xbf16> to vector<8x4x128xbf16>
    %10 = arith.mulf %1, %9 : vector<8x4x128xbf16>
    %11 = vector.broadcast %8 : vector<8x1x128xbf16> to vector<8x4x128xbf16>
    %12 = arith.mulf %4, %11 : vector<8x4x128xbf16>
    %13 = arith.addf %10, %12 : vector<8x4x128xbf16>
    %c0_7 = arith.constant 0 : index
    %c0_8 = arith.constant 0 : index
    %c0_9 = arith.constant 0 : index
    %c0_10 = arith.constant 0 : index
    %14 = vector.load %arg5[%c0_7, %c0_8, %c0_9, %c0_10] : memref<1x8x4x128xbf16, #tpu.memory_space<vmem>>, vector<1x8x4x128xbf16>
    %15 = vector.shape_cast %14 : vector<1x8x4x128xbf16> to vector<8x4x128xbf16>
    %16 = vector.shape_cast %13 : vector<8x4x128xbf16> to vector<1x8x4x128xbf16>
    tpu.vector_store %arg5[%c0_7, %c0_8, %c0_9, %c0_10], %16 {strides = array<i32>} : memref<1x8x4x128xbf16, #tpu.memory_space<vmem>>, vector<1x8x4x128xbf16>,
    return
  }
  func.func @transform_0(%arg0: i32, %arg1: i32) -> (i32, i32) {
    %c0_i32 = arith.constant 0 : i32
    %c0_i32_0 = arith.constant 0 : i32
    return %arg0, %c0_i32 : i32, i32
  }
  func.func @transform_1(%arg0: i32, %arg1: i32) -> (i32, i32) {
    %c0_i32 = arith.constant 0 : i32
    %c0_i32_0 = arith.constant 0 : i32
    return %arg0, %c0_i32 : i32, i32
  }
  func.func @transform_2(%arg0: i32, %arg1: i32) -> (i32, i32, i32, i32) {
    %c0_i32 = arith.constant 0 : i32
    %c0_i32_0 = arith.constant 0 : i32
    %c0_i32_1 = arith.constant 0 : i32
    return %arg1, %arg0, %c0_i32, %c0_i32_0 : i32, i32, i32, i32
  }
  func.func @transform_3(%arg0: i32, %arg1: i32) -> (i32, i32, i32, i32) {
    %c0_i32 = arith.constant 0 : i32
    %c0_i32_0 = arith.constant 0 : i32
    %c0_i32_1 = arith.constant 0 : i32
    return %arg1, %arg0, %c0_i32, %c0_i32_0 : i32, i32, i32, i32
  }
}

</mosaic_0001>

<llo_original>
// kernel: tpu_custom_call.1
$region0: #{tpu_custom_call.1}
  #allocation0 [shape = 'u32[]', space=smem, size = 0x4, offset = 0x4, fixed_abs, tag = 'smem constant byte address 0x4 - core index']
  #allocation1 [shape = 'u32[144,128]{1,0:T(1,128)}', space=vmem, size = 0x12000, scoped, tag = 'internal scratch']
  %s0 = inlined_call_operand.hbm [shape: bf16[8,128], index: 0, kind: input, shape index: {}]
  %s1 = inlined_call_operand.hbm [shape: bf16[8,128], index: 1, kind: input, shape index: {}]
  %s2 = inlined_call_operand.hbm [shape: bf16[2,8,4,128], index: 2, kind: input, shape index: {}]
  %s3 = inlined_call_operand.hbm [shape: bf16[2,8,4,128], index: 3, kind: output, shape index: {}]
  %s4 = sld [smem:[#allocation0]]
  $region57: #{tpu_custom_call.1} parent=0
    _
  %s6 = ssub.s32 1, %s4
  %s7 = scalar_select 0, %s6, %s4
  $region1: #{tpu_custom_call.1} parent=0
    #allocation2 [shape = 'u8[2048]{0}', space=vmem, size = 0x800, scoped, tag = 'input window, operand 0, single buffered']
    #allocation3 [shape = 's32[2]{0}', space=sflag, size = 0x8, scoped, tag = 'scoped memory for tpu_custom_call.1']
    #allocation4 [shape = 's32[2]{0}', space=sflag, size = 0x8, scoped, tag = 'scoped memory for tpu_custom_call.1']
    #allocation5 [shape = 'u8[2048]{0}', space=vmem, size = 0x800, scoped, tag = 'input window, operand 1, single buffered']
    #allocation6 [shape = 's32[1]{0}', space=sflag, size = 0x4, scoped, tag = 'scoped memory for tpu_custom_call.1']
    #allocation7 [shape = 'u8[16384]{0}', space=vmem, size = 0x4000, scoped, tag = 'input window, operand 2']
    #allocation8 [shape = 'u8[16384]{0}', space=vmem, size = 0x4000, scoped, tag = 'output window, operand 0']
    %8 = vsyncpa [#allocation3], 0
    %9 = vsyncpa [#allocation6], 0
    %10 = vsyncpa [#allocation4], 0
    %s11 = scalar_lea.sflag [#allocation4], 1
    %12 = vsyncpa %s11, 0
    loop: start=0, step=1, limit=4
    $region2: #{tpu_custom_call.1} parent=1 // loop_pre_header
      _
    $region3: #{tpu_custom_call.1} parent=1 // loop_header
      %s14 = sphi 0, %s18
      %p15 = scmp.ge.s32.totalorder %s14, 4
      %s21 = sphi 0, %s33
      %s22 = sphi 0, %s29
      %s23 = sphi 0, %s21
      %s24 = sphi 0, %s22
      %s25 = sphi 0, %s23
      %s26 = sphi 0, %s24
      %s36 = sphi 0, %s38
      %s39 = sphi 0, %s36
      %s40 = sphi 0, %s39
      %s56 = sphi 0, %s40
      %s62 = sphi 0, %s64
      %s65 = sphi 0, %s62
      %s66 = sphi 0, %s65
      %s82 = sphi 0, %s66
      %s90 = sphi 0, %s92
      %s93 = sphi 0, %s90
      %s94 = sphi 0, %s93
      %s110 = sphi 0, %s94
      %s118 = sphi 0, %s120
      %s121 = sphi 0, %s118
      %s122 = sphi 0, %s121
      %s138 = sphi 0, %s122
    $region4: #{tpu_custom_call.1} parent=1 // loop_header_branch
      %17 = sbr.rel (%p15) target = $region8
    $region5: #{tpu_custom_call.1} parent=1 // loop_body
      %s19 = ssub.s32 %s14, 1
      %s20 = ssub.s32 %s14, 2
      %s27 = sadd.s32 1, %s22
      %p28 = scmp.ge.s32.totalorder %s27, 2
      %s29 = scalar_select %p28, 0, %s27
      %s30 = sadd.s32 1, %s21
      %s31 = scalar_select %p28, %s30, %s21
      %p32 = scmp.ge.s32.totalorder %s31, 1
      %s33 = scalar_select %p32, 0, %s31
      %s34 = ssub.s32 %s21, %s33
      %p35 = scmp.eq.s32.totalorder %s34, 0
      %s37 = sadd.s32 %s36, 1
      %s38 = scalar_select %p35, %s36, %s37
      %p41 = pneg %p35
      %p42 = scmp.eq.s32.totalorder %s14, 1
      %p43 = por %p41, %p42
      %p44 = scmp.ne.s32.totalorder %s36, %s39
      %p45 = scmp.eq.s32.totalorder %s14, 0
      %p46 = por %p44, %p45
      %p47 = scmp.ne.s32.totalorder %s36, %s39
      %p48 = scmp.eq.s32.totalorder %s19, 1
      %p49 = por %p47, %p48
      %p50 = scmp.ne.s32.totalorder %s39, %s40
      %p51 = scmp.eq.s32.totalorder %s19, 0
      %p52 = por %p50, %p51
      %p53 = scmp.ne.s32.totalorder %s39, %s40
      %p54 = scmp.eq.s32.totalorder %s20, 1
      %p55 = por %p53, %p54
      %p57 = scmp.ne.s32.totalorder %s40, %s56
      %p58 = scmp.eq.s32.totalorder %s20, 0
      %p59 = por %p57, %p58
      %s60 = ssub.s32 %s21, %s33
      %p61 = scmp.eq.s32.totalorder %s60, 0
      %s63 = sadd.s32 %s62, 1
      %s64 = scalar_select %p61, %s62, %s63
      %p67 = pneg %p61
      %p68 = scmp.eq.s32.totalorder %s14, 1
      %p69 = por %p67, %p68
      %p70 = scmp.ne.s32.totalorder %s62, %s65
      %p71 = scmp.eq.s32.totalorder %s14, 0
      %p72 = por %p70, %p71
      %p73 = scmp.ne.s32.totalorder %s62, %s65
      %p74 = scmp.eq.s32.totalorder %s19, 1
      %p75 = por %p73, %p74
      %p76 = scmp.ne.s32.totalorder %s65, %s66
      %p77 = scmp.eq.s32.totalorder %s19, 0
      %p78 = por %p76, %p77
      %p79 = scmp.ne.s32.totalorder %s65, %s66
      %p80 = scmp.eq.s32.totalorder %s20, 1
      %p81 = por %p79, %p80
      %p83 = scmp.ne.s32.totalorder %s66, %s82
      %p84 = scmp.eq.s32.totalorder %s20, 0
      %p85 = por %p83, %p84
      %s86 = ssub.s32 %s22, %s29
      %s87 = ssub.s32 %s21, %s33
      %s88 = sor.u32 %s86, %s87
      %p89 = scmp.eq.s32.totalorder %s88, 0
      %s91 = sadd.s32 %s90, 1
      %s92 = scalar_select %p89, %s90, %s91
      %p95 = pneg %p89
      %p96 = scmp.eq.s32.totalorder %s14, 1
      %p97 = por %p95, %p96
      %p98 = scmp.ne.s32.totalorder %s90, %s93
      %p99 = scmp.eq.s32.totalorder %s14, 0
      %p100 = por %p98, %p99
      %p101 = scmp.ne.s32.totalorder %s90, %s93
      %p102 = scmp.eq.s32.totalorder %s19, 1
      %p103 = por %p101, %p102
      %p104 = scmp.ne.s32.totalorder %s93, %s94
      %p105 = scmp.eq.s32.totalorder %s19, 0
      %p106 = por %p104, %p105
      %p107 = scmp.ne.s32.totalorder %s93, %s94
      %p108 = scmp.eq.s32.totalorder %s20, 1
      %p109 = por %p107, %p108
      %p111 = scmp.ne.s32.totalorder %s94, %s110
      %p112 = scmp.eq.s32.totalorder %s20, 0
      %p113 = por %p111, %p112
      %s114 = ssub.s32 %s22, %s29
      %s115 = ssub.s32 %s21, %s33
      %s116 = sor.u32 %s114, %s115
      %p117 = scmp.eq.s32.totalorder %s116, 0
      %s119 = sadd.s32 %s118, 1
      %s120 = scalar_select %p117, %s118, %s119
      %p123 = pneg %p117
      %p124 = scmp.eq.s32.totalorder %s14, 1
      %p125 = por %p123, %p124
      %p126 = scmp.ne.s32.totalorder %s118, %s121
      %p127 = scmp.eq.s32.totalorder %s14, 0
      %p128 = por %p126, %p127
      %p129 = scmp.ne.s32.totalorder %s118, %s121
      %p130 = scmp.eq.s32.totalorder %s19, 1
      %p131 = por %p129, %p130
      %p132 = scmp.ne.s32.totalorder %s121, %s122
      %p133 = scmp.eq.s32.totalorder %s19, 0
      %p134 = por %p132, %p133
      %p135 = scmp.ne.s32.totalorder %s121, %s122
      %p136 = scmp.eq.s32.totalorder %s20, 1
      %p137 = por %p135, %p136
      %p139 = scmp.ne.s32.totalorder %s122, %s138
      %p140 = scmp.eq.s32.totalorder %s20, 0
      %p141 = por %p139, %p140
      %p142 = scmp.le.s32.totalorder 1, %s14
      %p143 = scmp.lt.s32.totalorder %s14, 3
      %p144 = pnand %p142, %p143
      %p145 = pneg %p144
      // Predicated region
      $region9: #{tpu_custom_call.1} parent=5 // pred_check
        _
      $region10: #{tpu_custom_call.1} parent=5 // pred_check_branch
        %147 = sbr.rel (%p144) target = $region12
      $region11: #{tpu_custom_call.1} parent=5 // pred_region
        %s148 = ssub.s32 %s14, 1
        // Predicated region
        $region13: #{tpu_custom_call.1} parent=11 // pred_check
          %p149 = pneg %p52
        $region14: #{tpu_custom_call.1} parent=11 // pred_check_branch
          %151 = sbr.rel (%p149) target = $region16
        $region15: #{tpu_custom_call.1} parent=11 // pred_region
          %s153 = ssub.s32 64, 64
          %154 = vsyncadd [#allocation3], %s153
          %s155 = smul.addr %s23, 64
          %s156 = scalar_lea.hbm %s0, %s155
          %s158 = sshll.u32 [#allocation2], 4
          %s159 = int_to_ptr.vmem [resolvable:$true] %s158
          %161 = dma.hbm_to_vmem [thread:$0]  %s156, 64, %s159, [#allocation3]
        $region16: #{tpu_custom_call.1} parent=11 // pred_fallthru
          _
        // Predicated region
        $region17: #{tpu_custom_call.1} parent=11 // pred_check
          %p162 = pneg %p78
        $region18: #{tpu_custom_call.1} parent=11 // pred_check_branch
          %164 = sbr.rel (%p162) target = $region20
        $region19: #{tpu_custom_call.1} parent=11 // pred_region
          %s166 = ssub.s32 64, 64
          %167 = vsyncadd [#allocation6], %s166
          %s168 = smul.addr %s23, 64
          %s169 = scalar_lea.hbm %s1, %s168
          %s171 = sshll.u32 [#allocation5], 4
          %s172 = int_to_ptr.vmem [resolvable:$true] %s171
          %174 = dma.hbm_to_vmem [thread:$0]  %s169, 64, %s172, [#allocation6]
        $region20: #{tpu_custom_call.1} parent=11 // pred_fallthru
          _
      $region12: #{tpu_custom_call.1} parent=5 // pred_fallthru
        _
      %p175 = scmp.lt.s32.totalorder %s14, 2
      // Predicated region
      $region21: #{tpu_custom_call.1} parent=5 // pred_check
        %p176 = pneg %p175
      $region22: #{tpu_custom_call.1} parent=5 // pred_check_branch
        %178 = sbr.rel (%p176) target = $region24
      $region23: #{tpu_custom_call.1} parent=5 // pred_region
        // Predicated region
        $region25: #{tpu_custom_call.1} parent=23 // pred_check
          %p179 = pneg %p100
        $region26: #{tpu_custom_call.1} parent=23 // pred_check_branch
          %181 = sbr.rel (%p179) target = $region28
        $region27: #{tpu_custom_call.1} parent=23 // pred_region
          %s182 = sand.u32 %s14, 1
          %s183 = scalar_lea.sflag [#allocation3], %s182
          %s184 = sand.u32 %s90, 1
          %s185 = smul.addr %s184, 16
          %s186 = scalar_lea.vmem [#allocation7], %s185
          %s187 = smul.u32 8, %s21
          %s189 = ssub.s32 256, 256
          %190 = vsyncadd %s183, %s189
          %s191 = smul.addr %s22, 8
          %s192 = sadd.s32 %s187, %s191
          %s193 = smul.addr %s192, 32
          %s194 = scalar_lea.hbm %s2, %s193
          %s195 = sshll.u32 %s186, 4
          %s196 = int_to_ptr.vmem [resolvable:$true] %s195
          %201 = dma.hbm_to_vmem [thread:$0]  %s194, 256, %s196, %s183, 32, 32, 2
        $region28: #{tpu_custom_call.1} parent=23 // pred_fallthru
          _
      $region24: #{tpu_custom_call.1} parent=5 // pred_fallthru
        _
      %p202 = scmp.le.s32.totalorder 1, %s14
      %p203 = scmp.lt.s32.totalorder %s14, 3
      %p204 = pnand %p202, %p203
      %p205 = pneg %p204
      // Predicated region
      $region29: #{tpu_custom_call.1} parent=5 // pred_check
        _
      $region30: #{tpu_custom_call.1} parent=5 // pred_check_branch
        %207 = sbr.rel (%p204) target = $region32
      $region31: #{tpu_custom_call.1} parent=5 // pred_region
        %s208 = ssub.s32 %s14, 1
        // Predicated region
        $region33: #{tpu_custom_call.1} parent=31 // pred_check
          %p209 = pneg %p52
        $region34: #{tpu_custom_call.1} parent=31 // pred_check_branch
          %211 = sbr.rel (%p209) target = $region36
        $region35: #{tpu_custom_call.1} parent=31 // pred_region
          %212 = dma.done [#allocation3], 64
        $region36: #{tpu_custom_call.1} parent=31 // pred_fallthru
          _
        // Predicated region
        $region37: #{tpu_custom_call.1} parent=31 // pred_check
          %p213 = pneg %p78
        $region38: #{tpu_custom_call.1} parent=31 // pred_check_branch
          %215 = sbr.rel (%p213) target = $region40
        $region39: #{tpu_custom_call.1} parent=31 // pred_region
          %216 = dma.done [#allocation6], 64
        $region40: #{tpu_custom_call.1} parent=31 // pred_fallthru
          _
        %s217 = sand.u32 %s19, 1
        %s218 = scalar_lea.sflag [#allocation3], %s217
        %s219 = sand.u32 %s93, 1
        %s220 = smul.addr %s219, 16
        %s221 = scalar_lea.vmem [#allocation7], %s220
        // Predicated region
        $region41: #{tpu_custom_call.1} parent=31 // pred_check
          %p222 = pneg %p106
        $region42: #{tpu_custom_call.1} parent=31 // pred_check_branch
          %224 = sbr.rel (%p222) target = $region44
        $region43: #{tpu_custom_call.1} parent=31 // pred_region
          %225 = dma.done %s218, 256
        $region44: #{tpu_custom_call.1} parent=31 // pred_fallthru
          _
        %p226 = pneg %p52
        %p227 = pneg %p49
        %p228 = pneg %p78
        %p229 = pneg %p75
        %s230 = sand.u32 %s19, 1
        %s231 = scalar_lea.sflag [#allocation3], %s230
        %s232 = sand.u32 %s93, 1
        %s233 = smul.addr %s232, 16
        %s234 = scalar_lea.vmem [#allocation7], %s233
        %p235 = pneg %p106
        %p236 = pneg %p103
        %p237 = pneg %p134
        %p238 = pneg %p131
        %s239 = sand.u32 %s121, 1
        %s240 = scalar_lea.sflag [#allocation4], %s239
        %s241 = sand.u32 %s121, 1
        %s242 = smul.addr %s241, 16
        %s243 = scalar_lea.vmem [#allocation8], %s242
        %s244 = smul.u32 8, %s23
        %s245 = smul.u32 8, %s23
        %v246 = vld [vmem:[%s221] sm:$0x3]
        %v247 = vld [vmem:[%s221 + $0x2] sm:$0x3]
        %v248 = vld [vmem:[%s221 + $0x4] sm:$0x3]
        %v249 = vld [vmem:[%s221 + $0x6] sm:$0x3]
        %v250 = vld [vmem:[%s221 + $0x8] sm:$0x3]
        %v251 = vld [vmem:[%s221 + $0xa] sm:$0x3]
        %v252 = vld [vmem:[%s221 + $0xc] sm:$0x3]
        %v253 = vld [vmem:[%s221 + $0xe] sm:$0x3]
        %v263 = vunpack.c.l.s4 1983009808
        %v264 = vunpack.c.0.s8 %v263
        %v265 = vlaneseq
        %v266 = vshrl.u32 %v265, 7
        %v267 = vsub.s32 %v264, %v266
        %v268 = vrot.slane %v246, %v267
        %v270 = vunpack.c.l.s4 1983009808
        %v271 = vunpack.c.0.s8 %v270
        %v272 = vlaneseq
        %v273 = vshrl.u32 %v272, 7
        %v274 = vsub.s32 %v271, %v273
        %v275 = vrot.slane %v247, %v274
        %v277 = vunpack.c.l.s4 1983009808
        %v278 = vunpack.c.0.s8 %v277
        %v279 = vlaneseq
        %v280 = vshrl.u32 %v279, 7
        %v281 = vsub.s32 %v278, %v280
        %v282 = vrot.slane %v248, %v281
        %v284 = vunpack.c.l.s4 1983009808
        %v285 = vunpack.c.0.s8 %v284
        %v286 = vlaneseq
        %v287 = vshrl.u32 %v286, 7
        %v288 = vsub.s32 %v285, %v287
        %v289 = vrot.slane %v249, %v288
        %v291 = vunpack.c.l.s4 1983009808
        %v292 = vunpack.c.0.s8 %v291
        %v293 = vlaneseq
        %v294 = vshrl.u32 %v293, 7
        %v295 = vsub.s32 %v292, %v294
        %v296 = vrot.slane %v250, %v295
        %v298 = vunpack.c.l.s4 1983009808
        %v299 = vunpack.c.0.s8 %v298
        %v300 = vlaneseq
        %v301 = vshrl.u32 %v300, 7
        %v302 = vsub.s32 %v299, %v301
        %v303 = vrot.slane %v251, %v302
        %v305 = vunpack.c.l.s4 1983009808
        %v306 = vunpack.c.0.s8 %v305
        %v307 = vlaneseq
        %v308 = vshrl.u32 %v307, 7
        %v309 = vsub.s32 %v306, %v308
        %v310 = vrot.slane %v252, %v309
        %v312 = vunpack.c.l.s4 1983009808
        %v313 = vunpack.c.0.s8 %v312
        %v314 = vlaneseq
        %v315 = vshrl.u32 %v314, 7
        %v316 = vsub.s32 %v313, %v315
        %v317 = vrot.slane %v253, %v316
        %318 = vrot.lane.b32.xlu0 %v268, 64
        %v319 = vpop.permute.xlu0 %318
        %320 = vrot.lane.b32.xlu0 %v275, 64
        %v321 = vpop.permute.xlu0 %320
        %322 = vrot.lane.b32.xlu0 %v282, 64
        %v323 = vpop.permute.xlu0 %322
        %324 = vrot.lane.b32.xlu0 %v289, 64
        %v325 = vpop.permute.xlu0 %324
        %326 = vrot.lane.b32.xlu0 %v296, 64
        %v327 = vpop.permute.xlu0 %326
        %328 = vrot.lane.b32.xlu0 %v303, 64
        %v329 = vpop.permute.xlu0 %328
        %330 = vrot.lane.b32.xlu0 %v310, 64
        %v331 = vpop.permute.xlu0 %330
        %332 = vrot.lane.b32.xlu0 %v317, 64
        %v333 = vpop.permute.xlu0 %332
        %v350 = vld [vmem:[#allocation2] sm:$0xf]
        %v353 = vunpack.c.l.s4 1966171168
        %v354 = vunpack.c.0.s8 %v353
        %v355 = vlaneseq
        %v356 = vshrl.u32 %v355, 7
        %v357 = vsub.s32 %v354, %v356
        %v358 = vrot.slane %v350, %v357
        %v359 = vcombine.high %v358, %v358
        %v361 = vunpack.c.l.s4 1966171168
        %v362 = vunpack.c.0.s8 %v361
        %v363 = vlaneseq
        %v364 = vshrl.u32 %v363, 7
        %v365 = vsub.s32 %v362, %v364
        %v366 = vrot.slane %v358, %v365
        %v368 = vunpack.c.l.s4 1966171168
        %v369 = vunpack.c.0.s8 %v368
        %v370 = vlaneseq
        %v371 = vshrl.u32 %v370, 7
        %v372 = vsub.s32 %v369, %v371
        %v373 = vrot.slane %v359, %v372
        %v374 = vcombine.high %v366, %v366
        %v375 = vcombine.high %v373, %v373
        %v376 = vunpack.i.l.s16 %v366
        %v377 = vunpack.i.h.s16 %v366
        %v378 = vunpack.i.l.s16 %v373
        %v379 = vunpack.i.h.s16 %v373
        %v380 = vunpack.i.l.s16 %v374
        %v381 = vunpack.i.h.s16 %v374
        %v382 = vunpack.i.l.s16 %v375
        %v383 = vunpack.i.h.s16 %v375
        %v384 = vld [vmem:[#allocation5] sm:$0xf]
        %v387 = vunpack.c.l.s4 1966171168
        %v388 = vunpack.c.0.s8 %v387
        %v389 = vlaneseq
        %v390 = vshrl.u32 %v389, 7
        %v391 = vsub.s32 %v388, %v390
        %v392 = vrot.slane %v384, %v391
        %v393 = vcombine.high %v392, %v392
        %v395 = vunpack.c.l.s4 1966171168
        %v396 = vunpack.c.0.s8 %v395
        %v397 = vlaneseq
        %v398 = vshrl.u32 %v397, 7
        %v399 = vsub.s32 %v396, %v398
        %v400 = vrot.slane %v392, %v399
        %v402 = vunpack.c.l.s4 1966171168
        %v403 = vunpack.c.0.s8 %v402
        %v404 = vlaneseq
        %v405 = vshrl.u32 %v404, 7
        %v406 = vsub.s32 %v403, %v405
        %v407 = vrot.slane %v393, %v406
        %v408 = vcombine.high %v400, %v400
        %v409 = vcombine.high %v407, %v407
        %v410 = vunpack.i.l.s16 %v400
        %v411 = vunpack.i.h.s16 %v400
        %v412 = vunpack.i.l.s16 %v407
        %v413 = vunpack.i.h.s16 %v407
        %v414 = vunpack.i.l.s16 %v408
        %v415 = vunpack.i.h.s16 %v408
        %v416 = vunpack.i.l.s16 %v409
        %v417 = vunpack.i.h.s16 %v409
        %v418 = vpack.i.b16 %v376, %v376
        %v419 = vpack.i.b16 %v377, %v377
        %v420 = vpack.i.b16 %v378, %v378
        %v421 = vpack.i.b16 %v379, %v379
        %v422 = vpack.i.b16 %v380, %v380
        %v423 = vpack.i.b16 %v381, %v381
        %v424 = vpack.i.b16 %v382, %v382
        %v425 = vpack.i.b16 %v383, %v383
        %v426 = vlaneseq
        %v427 = vshrl.u32 %v426, 7
        %v428 = vsub.s32 0, %v427
        %v429 = vrot.slane %v418, %v428
        %v430 = vlaneseq
        %v431 = vshrl.u32 %v430, 7
        %v432 = vsub.s32 0, %v431
        %v433 = vrot.slane %v419, %v432
        %v434 = vlaneseq
        %v435 = vshrl.u32 %v434, 7
        %v436 = vsub.s32 0, %v435
        %v437 = vrot.slane %v420, %v436
        %v438 = vlaneseq
        %v439 = vshrl.u32 %v438, 7
        %v440 = vsub.s32 0, %v439
        %v441 = vrot.slane %v421, %v440
        %v442 = vlaneseq
        %v443 = vshrl.u32 %v442, 7
        %v444 = vsub.s32 0, %v443
        %v445 = vrot.slane %v422, %v444
        %v446 = vlaneseq
        %v447 = vshrl.u32 %v446, 7
        %v448 = vsub.s32 0, %v447
        %v449 = vrot.slane %v423, %v448
        %v450 = vlaneseq
        %v451 = vshrl.u32 %v450, 7
        %v452 = vsub.s32 0, %v451
        %v453 = vrot.slane %v424, %v452
        %v454 = vlaneseq
        %v455 = vshrl.u32 %v454, 7
        %v456 = vsub.s32 0, %v455
        %v457 = vrot.slane %v425, %v456
        %v459 = vpack.i.b16 %v429, %v429
        %v461 = vlaneseq
        %v462 = vshrl.u32 %v461, 7
        %v463 = vsub.s32 0, %v462
        %v464 = vrot.slane %v459, %v463
        %v466 = vpack.i.b16 %v433, %v433
        %v468 = vlaneseq
        %v469 = vshrl.u32 %v468, 7
        %v470 = vsub.s32 0, %v469
        %v471 = vrot.slane %v466, %v470
        %v473 = vpack.i.b16 %v437, %v437
        %v475 = vlaneseq
        %v476 = vshrl.u32 %v475, 7
        %v477 = vsub.s32 0, %v476
        %v478 = vrot.slane %v473, %v477
        %v480 = vpack.i.b16 %v441, %v441
        %v482 = vlaneseq
        %v483 = vshrl.u32 %v482, 7
        %v484 = vsub.s32 0, %v483
        %v485 = vrot.slane %v480, %v484
        %v487 = vpack.i.b16 %v445, %v445
        %v489 = vlaneseq
        %v490 = vshrl.u32 %v489, 7
        %v491 = vsub.s32 0, %v490
        %v492 = vrot.slane %v487, %v491
        %v494 = vpack.i.b16 %v449, %v449
        %v496 = vlaneseq
        %v497 = vshrl.u32 %v496, 7
        %v498 = vsub.s32 0, %v497
        %v499 = vrot.slane %v494, %v498
        %v501 = vpack.i.b16 %v453, %v453
        %v503 = vlaneseq
        %v504 = vshrl.u32 %v503, 7
        %v505 = vsub.s32 0, %v504
        %v506 = vrot.slane %v501, %v505
        %v508 = vpack.i.b16 %v457, %v457
        %v510 = vlaneseq
        %v511 = vshrl.u32 %v510, 7
        %v512 = vsub.s32 0, %v511
        %v513 = vrot.slane %v508, %v512
        %v514 = vmul.bf16 %v246, %v464
        %v515 = vmul.bf16 %v247, %v471
        %v516 = vmul.bf16 %v248, %v478
        %v517 = vmul.bf16 %v249, %v485
        %v518 = vmul.bf16 %v250, %v492
        %v519 = vmul.bf16 %v251, %v499
        %v520 = vmul.bf16 %v252, %v506
        %v521 = vmul.bf16 %v253, %v513
        %v522 = vpack.i.b16 %v410, %v410
        %v523 = vpack.i.b16 %v411, %v411
        %v524 = vpack.i.b16 %v412, %v412
        %v525 = vpack.i.b16 %v413, %v413
        %v526 = vpack.i.b16 %v414, %v414
        %v527 = vpack.i.b16 %v415, %v415
        %v528 = vpack.i.b16 %v416, %v416
        %v529 = vpack.i.b16 %v417, %v417
        %v530 = vlaneseq
        %v531 = vshrl.u32 %v530, 7
        %v532 = vsub.s32 0, %v531
        %v533 = vrot.slane %v522, %v532
        %v534 = vlaneseq
        %v535 = vshrl.u32 %v534, 7
        %v536 = vsub.s32 0, %v535
        %v537 = vrot.slane %v523, %v536
        %v538 = vlaneseq
        %v539 = vshrl.u32 %v538, 7
        %v540 = vsub.s32 0, %v539
        %v541 = vrot.slane %v524, %v540
        %v542 = vlaneseq
        %v543 = vshrl.u32 %v542, 7
        %v544 = vsub.s32 0, %v543
        %v545 = vrot.slane %v525, %v544
        %v546 = vlaneseq
        %v547 = vshrl.u32 %v546, 7
        %v548 = vsub.s32 0, %v547
        %v549 = vrot.slane %v526, %v548
        %v550 = vlaneseq
        %v551 = vshrl.u32 %v550, 7
        %v552 = vsub.s32 0, %v551
        %v553 = vrot.slane %v527, %v552
        %v554 = vlaneseq
        %v555 = vshrl.u32 %v554, 7
        %v556 = vsub.s32 0, %v555
        %v557 = vrot.slane %v528, %v556
        %v558 = vlaneseq
        %v559 = vshrl.u32 %v558, 7
        %v560 = vsub.s32 0, %v559
        %v561 = vrot.slane %v529, %v560
        %v563 = vpack.i.b16 %v533, %v533
        %v565 = vlaneseq
        %v566 = vshrl.u32 %v565, 7
        %v567 = vsub.s32 0, %v566
        %v568 = vrot.slane %v563, %v567
        %v570 = vpack.i.b16 %v537, %v537
        %v572 = vlaneseq
        %v573 = vshrl.u32 %v572, 7
        %v574 = vsub.s32 0, %v573
        %v575 = vrot.slane %v570, %v574
        %v577 = vpack.i.b16 %v541, %v541
        %v579 = vlaneseq
        %v580 = vshrl.u32 %v579, 7
        %v581 = vsub.s32 0, %v580
        %v582 = vrot.slane %v577, %v581
        %v584 = vpack.i.b16 %v545, %v545
        %v586 = vlaneseq
        %v587 = vshrl.u32 %v586, 7
        %v588 = vsub.s32 0, %v587
        %v589 = vrot.slane %v584, %v588
        %v591 = vpack.i.b16 %v549, %v549
        %v593 = vlaneseq
        %v594 = vshrl.u32 %v593, 7
        %v595 = vsub.s32 0, %v594
        %v596 = vrot.slane %v591, %v595
        %v598 = vpack.i.b16 %v553, %v553
        %v600 = vlaneseq
        %v601 = vshrl.u32 %v600, 7
        %v602 = vsub.s32 0, %v601
        %v603 = vrot.slane %v598, %v602
        %v605 = vpack.i.b16 %v557, %v557
        %v607 = vlaneseq
        %v608 = vshrl.u32 %v607, 7
        %v609 = vsub.s32 0, %v608
        %v610 = vrot.slane %v605, %v609
        %v612 = vpack.i.b16 %v561, %v561
        %v614 = vlaneseq
        %v615 = vshrl.u32 %v614, 7
        %v616 = vsub.s32 0, %v615
        %v617 = vrot.slane %v612, %v616
        %v618 = vmul.bf16 %v319, %v568
        %v619 = vmul.bf16 %v321, %v575
        %v620 = vmul.bf16 %v323, %v582
        %v621 = vmul.bf16 %v325, %v589
        %v622 = vmul.bf16 %v327, %v596
        %v623 = vmul.bf16 %v329, %v603
        %v624 = vmul.bf16 %v331, %v610
        %v625 = vmul.bf16 %v333, %v617
        %v626 = vadd.bf16 %v514, %v618
        %v627 = vadd.bf16 %v515, %v619
        %v628 = vadd.bf16 %v516, %v620
        %v629 = vadd.bf16 %v517, %v621
        %v630 = vadd.bf16 %v518, %v622
        %v631 = vadd.bf16 %v519, %v623
        %v632 = vadd.bf16 %v520, %v624
        %v633 = vadd.bf16 %v521, %v625
        %634 = vst [vmem:[%s243] sm:$0x3] %v626
        %635 = vst [vmem:[%s243 + $0x2] sm:$0x3] %v627
        %636 = vst [vmem:[%s243 + $0x4] sm:$0x3] %v628
        %637 = vst [vmem:[%s243 + $0x6] sm:$0x3] %v629
        %638 = vst [vmem:[%s243 + $0x8] sm:$0x3] %v630
        %639 = vst [vmem:[%s243 + $0xa] sm:$0x3] %v631
        %640 = vst [vmem:[%s243 + $0xc] sm:$0x3] %v632
        %641 = vst [vmem:[%s243 + $0xe] sm:$0x3] %v633
        %s642 = sand.u32 %s121, 1
        %s643 = scalar_lea.sflag [#allocation4], %s642
        %s644 = sand.u32 %s121, 1
        %s645 = smul.addr %s644, 16
        %s646 = scalar_lea.vmem [#allocation8], %s645
        // Predicated region
        $region45: #{tpu_custom_call.1} parent=31 // pred_check
          %p647 = pneg %p131
        $region46: #{tpu_custom_call.1} parent=31 // pred_check_branch
          %649 = sbr.rel (%p647) target = $region48
        $region47: #{tpu_custom_call.1} parent=31 // pred_region
          %s650 = smul.u32 8, %s23
          %s652 = ssub.s32 256, 256
          %653 = vsyncadd %s643, %s652
          %s654 = smul.addr %s24, 8
          %s655 = sadd.s32 %s650, %s654
          %s656 = smul.addr %s655, 32
          %s657 = scalar_lea.hbm %s3, %s656
          %s658 = sshll.u32 %s646, 4
          %s659 = int_to_ptr.vmem [resolvable:$true] %s658
          %664 = dma.vmem_to_hbm [thread:$0]  %s659, 256, %s657, %s643, 32, 32, 2
        $region48: #{tpu_custom_call.1} parent=31 // pred_fallthru
          _
      $region32: #{tpu_custom_call.1} parent=5 // pred_fallthru
        _
      %p665 = scmp.le.s32.totalorder 2, %s14
      // Predicated region
      $region49: #{tpu_custom_call.1} parent=5 // pred_check
        %p666 = pneg %p665
      $region50: #{tpu_custom_call.1} parent=5 // pred_check_branch
        %668 = sbr.rel (%p666) target = $region52
      $region51: #{tpu_custom_call.1} parent=5 // pred_region
        %s669 = ssub.s32 %s14, 2
        // Predicated region
        $region53: #{tpu_custom_call.1} parent=51 // pred_check
          %p670 = pneg %p137
        $region54: #{tpu_custom_call.1} parent=51 // pred_check_branch
          %672 = sbr.rel (%p670) target = $region56
        $region55: #{tpu_custom_call.1} parent=51 // pred_region
          %s673 = sand.u32 %s122, 1
          %s674 = scalar_lea.sflag [#allocation4], %s673
          %s675 = sand.u32 %s122, 1
          %s676 = smul.addr %s675, 16
          %s677 = scalar_lea.vmem [#allocation8], %s676
          %678 = dma.done %s674, 256
        $region56: #{tpu_custom_call.1} parent=51 // pred_fallthru
          _
      $region52: #{tpu_custom_call.1} parent=5 // pred_fallthru
        _
    $region6: #{tpu_custom_call.1} parent=1 // loop_footer
      %s18 = sadd.s32 1, %s14
    $region7: #{tpu_custom_call.1} parent=1 // loop_footer_branch
      %13 = sbr.rel target = $region3
    $region8: #{tpu_custom_call.1} parent=1 // loop_exit
      _
    %679 = vsyncpa [#allocation3], 1
    %s680 = scalar_lea.sflag [#allocation3], 1
    %681 = vsyncpa %s680, 1
    %682 = vsyncpa [#allocation6], 1
    %683 = vsyncpa [#allocation4], 1
    %s684 = scalar_lea.sflag [#allocation4], 1
    %685 = vsyncpa %s684, 1

</llo_original>
